<compile_context>
chip_gen: v7x
topology: tpu7x:2x2x1
jax: 0.10.0
libtpu: 0.0.40
codegen_flags: <defaults>
</compile_context>

<pallas_src>
import jax
import jax.numpy as jnp
from jax.experimental import pallas as pl
from jax.experimental.pallas import tpu as pltpu


def _round_up(n, m):
    return ((n + m - 1) // m) * m


def npi_kernel(xin_ref, c_ref, wg_ref, wh_ref, bh_ref,
               head_ref, h_out_ref, c_out_ref):
    Hp = c_ref.shape[1]   # 128-lane padded hidden width

    # Single fused MXU dot -> all four LSTM gates; bias folded in via the ones
    # column of xin.  Gate groups are Hp(-multiple-of-128)-lane aligned.
    gates = jnp.dot(xin_ref[...], wg_ref[...],
                    precision=jax.lax.Precision.DEFAULT,   # deliberate: bf16 MXU passes
                    preferred_element_type=jnp.float32)    # (TB, 4*Hp), f32

    def sigmoid(v):
        # 1/(1+exp(-v)) == 0.5*tanh(0.5*v)+0.5; tanh is a single EUP pass.
        return 0.5 * jnp.tanh(0.5 * v) + 0.5

    # PyTorch LSTMCell gate order: [i, f, g, o].  Slices are vreg-aligned.
    i_g = sigmoid(gates[:, 0 * Hp:1 * Hp])
    f_g = sigmoid(gates[:, 1 * Hp:2 * Hp])
    g_g = jnp.tanh(gates[:, 2 * Hp:3 * Hp])
    o_g = sigmoid(gates[:, 3 * Hp:4 * Hp])

    # Padding lanes stay exactly zero: gate pad-cols are zero -> g_g = 0 and
    # tanh(c_new) = 0 there, so h_new/c_new padding remains 0.
    c_new = f_g * c_ref[...] + i_g * g_g
    h_new = o_g * jnp.tanh(c_new)

    c_out_ref[...] = c_new          # lane-dense (TB, Hp) unmasked store
    h_out_ref[...] = h_new          # lane-dense (TB, Hp) unmasked store

    # Fused (subroutine_selector | output_layer) head: one dot, one lane-dense
    # (TB, n_pad >= 128) unmasked store.  Pad columns carry zero weight/bias.
    head_ref[...] = (jnp.dot(h_new.astype(wh_ref.dtype), wh_ref[...],
                             precision=jax.lax.Precision.DEFAULT,
                             preferred_element_type=jnp.float32)
                     + bh_ref[...])


def init_params(key, input_size, hidden_size, num_subroutines):
    """Raw parameters with the same shapes/semantics as the PyTorch module."""
    ks = jax.random.split(key, 9)
    H, D, S = hidden_size, input_size, num_subroutines
    scale = 0.1
    return dict(
        embedding=scale * jax.random.normal(ks[0], (S, H), jnp.float32),
        w_ih=scale * jax.random.normal(ks[1], (4 * H, D + H), jnp.float32),
        w_hh=scale * jax.random.normal(ks[2], (4 * H, H), jnp.float32),
        b_ih=scale * jax.random.normal(ks[3], (4 * H,), jnp.float32),
        b_hh=scale * jax.random.normal(ks[4], (4 * H,), jnp.float32),
        w_sel=scale * jax.random.normal(ks[5], (S, H), jnp.float32),
        b_sel=scale * jax.random.normal(ks[6], (S,), jnp.float32),
        w_out=scale * jax.random.normal(ks[7], (1, H), jnp.float32),
        b_out=scale * jax.random.normal(ks[8], (1,), jnp.float32),
    )


def prepare_params(params, matmul_dtype=jnp.float32):
    """One-time (per model, NOT per call) weight fusion / padding / transposition.

    matmul_dtype=jnp.bfloat16 is the recommended production setting for
    v6e/v7x (halves weight DMA + VMEM, 2-3x MXU throughput); float32 is kept
    as the default here so the 1e-5 correctness check in __main__ holds.
    """
    H = params["w_hh"].shape[1]
    D = params["w_ih"].shape[1] - H
    S = params["w_sel"].shape[0]

    Hp = _round_up(H, 128)                 # lane-aligned per-gate group width
    k_raw = D + 2 * H + 1                  # rows: [x | emb | h | bias-one]
    k_pad = _round_up(k_raw, 128)          # lane-aligned contraction dim
    n_pad = _round_up(S + 1, 128)          # lane-aligned fused head width

    # ---- fused gate weight (k_pad, 4*Hp): gate g occupies cols [g*Hp, g*Hp+H)
    w_in = params["w_ih"].T                # (D+H, 4H) rows for [x | emb]
    w_hh = params["w_hh"].T                # (H,   4H) rows for h
    b_lstm = params["b_ih"] + params["b_hh"]
    w_gates = jnp.zeros((k_pad, 4 * Hp), jnp.float32)
    for g in range(4):
        col = g * Hp
        w_gates = w_gates.at[:D + H, col:col + H].set(w_in[:, g * H:(g + 1) * H])
        w_gates = w_gates.at[D + H:D + 2 * H, col:col + H].set(
            w_hh[:, g * H:(g + 1) * H])
        w_gates = w_gates.at[D + 2 * H, col:col + H].set(b_lstm[g * H:(g + 1) * H])

    # ---- fused output head (Hp, n_pad): cols = [logits (S) | output (1) | pad]
    w_head = jnp.zeros((Hp, n_pad), jnp.float32)
    w_head = w_head.at[:H, :S].set(params["w_sel"].T)
    w_head = w_head.at[:H, S:S + 1].set(params["w_out"].T)
    b_head = jnp.zeros((1, n_pad), jnp.float32)
    b_head = b_head.at[0, :S].set(params["b_sel"])
    b_head = b_head.at[0, S:S + 1].set(params["b_out"])

    return dict(embedding=params["embedding"],
                w_gates=w_gates.astype(matmul_dtype),
                w_head=w_head.astype(matmul_dtype),
                b_head=b_head,
                dims=(D, H, S, Hp, k_pad, n_pad))


def npi_forward(x, subroutine_id, h, c, prep):
    D, H, S, Hp, k_pad, n_pad = prep["dims"]
    B = x.shape[0]
    mm_dtype = prep["w_gates"].dtype

    # Wrapper-side glue: data-dependent embedding gather + fused-input assembly
    # (single-step module; with an in-kernel time loop this would move on-chip).
    emb = jnp.take(prep["embedding"], subroutine_id, axis=0)            # (B, H)
    tail = jnp.zeros((B, k_pad - (D + 2 * H)), jnp.float32).at[:, 0].set(1.0)
    fused_in = jnp.concatenate([x, emb, h, tail], axis=1).astype(mm_dtype)

    # Batch tiling: sublane-aligned, 256-cap for the 256-wide v6e/v7x MXU, and
    # split into >=2 parallel blocks when the batch allows (v7x megacore).
    tb = min(256, _round_up(B, 8))
    if B > 8 and _round_up(B, tb) // tb < 2:
        tb = _round_up(-(-B // 2), 8)
    b_pad = _round_up(B, tb)

    c_in = jnp.zeros((b_pad, Hp), jnp.float32).at[:B, :H].set(c)
    if b_pad != B:
        fused_in = jnp.pad(fused_in, ((0, b_pad - B), (0, 0)))

    # Explicit VMEM budget: weights + double-buffered activation/output tiles.
    itemsize = jnp.dtype(mm_dtype).itemsize
    vmem_need = ((prep["w_gates"].size + prep["w_head"].size) * itemsize
                 + prep["b_head"].size * 4
                 + 2 * tb * k_pad * itemsize        # activation tile (x2 bufs)
                 + 2 * tb * Hp * 4                  # c tile (x2 bufs)
                 + 2 * tb * (n_pad + 2 * Hp) * 4)   # output tiles (x2 bufs)
    vmem_limit = int(min(max(2 * vmem_need, 4 << 20), 100 << 20))

    head, h_new, c_new = pl.pallas_call(
        npi_kernel,
        out_shape=(
            jax.ShapeDtypeStruct((b_pad, n_pad), jnp.float32),   # fused head
            jax.ShapeDtypeStruct((b_pad, Hp), jnp.float32),      # h' (padded)
            jax.ShapeDtypeStruct((b_pad, Hp), jnp.float32),      # c' (padded)
        ),
        grid_spec=pltpu.PrefetchScalarGridSpec(
            num_scalar_prefetch=0,
            grid=(b_pad // tb,),
            in_specs=[
                pl.BlockSpec((tb, k_pad), lambda i: (i, 0)),      # activations
                pl.BlockSpec((tb, Hp), lambda i: (i, 0)),         # c (padded)
                pl.BlockSpec((k_pad, 4 * Hp), lambda i: (0, 0)),  # fused gate W
                pl.BlockSpec((Hp, n_pad), lambda i: (0, 0)),      # fused head W
                pl.BlockSpec((1, n_pad), lambda i: (0, 0)),       # fused head b
            ],
            out_specs=[
                pl.BlockSpec((tb, n_pad), lambda i: (i, 0)),
                pl.BlockSpec((tb, Hp), lambda i: (i, 0)),
                pl.BlockSpec((tb, Hp), lambda i: (i, 0)),
            ],
        ),
        compiler_params=pltpu.CompilerParams(
            dimension_semantics=("parallel",),
            vmem_limit_bytes=vmem_limit),
    )(fused_in, c_in, prep["w_gates"], prep["w_head"], prep["b_head"])

    output = head[:B, S:S + 1]
    logits = head[:B, :S]
    return output, logits, h_new[:B, :H], c_new[:B, :H]


def npi_reference(x, subroutine_id, h, c, params):
    """Pure-JAX reference mirroring torch.nn.LSTMCell / Linear semantics."""
    H = h.shape[1]
    emb = jnp.take(params["embedding"], subroutine_id, axis=0)
    lstm_in = jnp.concatenate([x, emb], axis=1)
    gates = (lstm_in @ params["w_ih"].T + params["b_ih"]
             + h @ params["w_hh"].T + params["b_hh"])
    i_g = jax.nn.sigmoid(gates[:, 0 * H:1 * H])
    f_g = jax.nn.sigmoid(gates[:, 1 * H:2 * H])
    g_g = jnp.tanh(gates[:, 2 * H:3 * H])
    o_g = jax.nn.sigmoid(gates[:, 3 * H:4 * H])
    c_new = f_g * c + i_g * g_g
    h_new = o_g * jnp.tanh(c_new)
    logits = h_new @ params["w_sel"].T + params["b_sel"]
    out = h_new @ params["w_out"].T + params["b_out"]
    return out, logits, h_new, c_new


if __name__ == "__main__":
    import numpy as np

    batch = 2
    input_size = 16
    hidden_size = 32
    num_subroutines = 8

    key = jax.random.PRNGKey(0)
    k_p, k_x, k_h, k_c, k_id = jax.random.split(key, 5)

    params = init_params(k_p, input_size, hidden_size, num_subroutines)
    prep = prepare_params(params)   # hoisted out of the per-call hot path

    x = jax.random.normal(k_x, (batch, input_size), jnp.float32)
    h = jax.random.normal(k_h, (batch, hidden_size), jnp.float32)
    c = jax.random.normal(k_c, (batch, hidden_size), jnp.float32)
    subroutine_id = jax.random.randint(k_id, (batch,), 0, num_subroutines)

    out, logits, h_new, c_new = jax.block_until_ready(
        npi_forward(x, subroutine_id, h, c, prep))

    ref_out, ref_logits, ref_h, ref_c = npi_reference(
        x, subroutine_id, h, c, params)

    np.testing.assert_allclose(out, ref_out, rtol=1e-5, atol=1e-5)
    np.testing.assert_allclose(logits, ref_logits, rtol=1e-5, atol=1e-5)
    np.testing.assert_allclose(h_new, ref_h, rtol=1e-5, atol=1e-5)
    np.testing.assert_allclose(c_new, ref_c, rtol=1e-5, atol=1e-5)

    print("KERNEL_OK")
</pallas_src>

<mosaic_0001>
module attributes {stable_mosaic.version = 11 : i64} {
  func.func @npi_kernel(%arg0: i32, %arg1: memref<8x128xf32, #tpu.memory_space<vmem>>, %arg2: memref<8x128xf32, #tpu.memory_space<vmem>>, %arg3: memref<128x512xf32, #tpu.memory_space<vmem>>, %arg4: memref<128x128xf32, #tpu.memory_space<vmem>>, %arg5: memref<1x128xf32, #tpu.memory_space<vmem>>, %arg6: memref<8x128xf32, #tpu.memory_space<vmem>>, %arg7: memref<8x128xf32, #tpu.memory_space<vmem>>, %arg8: memref<8x128xf32, #tpu.memory_space<vmem>>) attributes {dimension_semantics = [#tpu.dimension_semantics<parallel>], iteration_bounds = array<i64: 1>, scalar_prefetch = 0 : i64, scratch_operands = 0 : i64, tpu.core_type = #tpu.core_type<tc>, window_params = [{transform_indices = @transform_0, window_bounds = array<i64: 8, 128>}, {transform_indices = @transform_1, window_bounds = array<i64: 8, 128>}, {pipeline_mode = #tpu.pipeline_mode<synchronous>, transform_indices = @transform_2, window_bounds = array<i64: 128, 512>}, {pipeline_mode = #tpu.pipeline_mode<synchronous>, transform_indices = @transform_3, window_bounds = array<i64: 128, 128>}, {pipeline_mode = #tpu.pipeline_mode<synchronous>, transform_indices = @transform_4, window_bounds = array<i64: 1, 128>}, {transform_indices = @transform_5, window_bounds = array<i64: 8, 128>}, {transform_indices = @transform_6, window_bounds = array<i64: 8, 128>}, {transform_indices = @transform_7, window_bounds = array<i64: 8, 128>}]} {
    %c0 = arith.constant 0 : index
    %c0_0 = arith.constant 0 : index
    %0 = vector.load %arg1[%c0, %c0_0] : memref<8x128xf32, #tpu.memory_space<vmem>>, vector<8x128xf32>
    %c0_1 = arith.constant 0 : index
    %c0_2 = arith.constant 0 : index
    %1 = vector.load %arg3[%c0_1, %c0_2] : memref<128x512xf32, #tpu.memory_space<vmem>>, vector<128x512xf32>
    %cst = arith.constant dense<0.000000e+00> : vector<8x512xf32>
    %2 = tpu.matmul %0, %1, %cst {dimension_numbers = #tpu.dot_dimension_numbers<[1], [0], [0], [1], [0, 0, 1, 1], [], []>} : vector<8x128xf32>, vector<128x512xf32>, vector<8x512xf32> -> vector<8x512xf32>
    %3 = vector.extract_strided_slice %2 {offsets = [0, 0], sizes = [8, 128], strides = [1, 1]} : vector<8x512xf32> to vector<8x128xf32>
    %cst_3 = arith.constant 5.000000e-01 : f32
    %4 = vector.broadcast %cst_3 : f32 to vector<8x128xf32>
    %5 = arith.mulf %4, %3 : vector<8x128xf32>
    %6 = math.tanh %5 : vector<8x128xf32>
    %cst_4 = arith.constant 5.000000e-01 : f32
    %7 = vector.broadcast %cst_4 : f32 to vector<8x128xf32>
    %8 = arith.mulf %7, %6 : vector<8x128xf32>
    %cst_5 = arith.constant 5.000000e-01 : f32
    %9 = vector.broadcast %cst_5 : f32 to vector<8x128xf32>
    %10 = arith.addf %8, %9 : vector<8x128xf32>
    %11 = vector.extract_strided_slice %2 {offsets = [0, 128], sizes = [8, 128], strides = [1, 1]} : vector<8x512xf32> to vector<8x128xf32>
    %cst_6 = arith.constant 5.000000e-01 : f32
    %12 = vector.broadcast %cst_6 : f32 to vector<8x128xf32>
    %13 = arith.mulf %12, %11 : vector<8x128xf32>
    %14 = math.tanh %13 : vector<8x128xf32>
    %cst_7 = arith.constant 5.000000e-01 : f32
    %15 = vector.broadcast %cst_7 : f32 to vector<8x128xf32>
    %16 = arith.mulf %15, %14 : vector<8x128xf32>
    %cst_8 = arith.constant 5.000000e-01 : f32
    %17 = vector.broadcast %cst_8 : f32 to vector<8x128xf32>
    %18 = arith.addf %16, %17 : vector<8x128xf32>
    %19 = vector.extract_strided_slice %2 {offsets = [0, 256], sizes = [8, 128], strides = [1, 1]} : vector<8x512xf32> to vector<8x128xf32>
    %20 = math.tanh %19 : vector<8x128xf32>
    %21 = vector.extract_strided_slice %2 {offsets = [0, 384], sizes = [8, 128], strides = [1, 1]} : vector<8x512xf32> to vector<8x128xf32>
    %cst_9 = arith.constant 5.000000e-01 : f32
    %22 = vector.broadcast %cst_9 : f32 to vector<8x128xf32>
    %23 = arith.mulf %22, %21 : vector<8x128xf32>
    %24 = math.tanh %23 : vector<8x128xf32>
    %cst_10 = arith.constant 5.000000e-01 : f32
    %25 = vector.broadcast %cst_10 : f32 to vector<8x128xf32>
    %26 = arith.mulf %25, %24 : vector<8x128xf32>
    %cst_11 = arith.constant 5.000000e-01 : f32
    %27 = vector.broadcast %cst_11 : f32 to vector<8x128xf32>
    %28 = arith.addf %26, %27 : vector<8x128xf32>
    %c0_12 = arith.constant 0 : index
    %c0_13 = arith.constant 0 : index
    %29 = vector.load %arg2[%c0_12, %c0_13] : memref<8x128xf32, #tpu.memory_space<vmem>>, vector<8x128xf32>
    %30 = arith.mulf %18, %29 : vector<8x128xf32>
    %31 = arith.mulf %10, %20 : vector<8x128xf32>
    %32 = arith.addf %30, %31 : vector<8x128xf32>
    %33 = math.tanh %32 : vector<8x128xf32>
    %34 = arith.mulf %28, %33 : vector<8x128xf32>
    %c0_14 = arith.constant 0 : index
    %c0_15 = arith.constant 0 : index
    %35 = vector.load %arg8[%c0_14, %c0_15] : memref<8x128xf32, #tpu.memory_space<vmem>>, vector<8x128xf32>
    tpu.vector_store %arg8[%c0_14, %c0_15], %32 {strides = array<i32>} : memref<8x128xf32, #tpu.memory_space<vmem>>, vector<8x128xf32>,
    %c0_16 = arith.constant 0 : index
    %c0_17 = arith.constant 0 : index
    %36 = vector.load %arg7[%c0_16, %c0_17] : memref<8x128xf32, #tpu.memory_space<vmem>>, vector<8x128xf32>
    tpu.vector_store %arg7[%c0_16, %c0_17], %34 {strides = array<i32>} : memref<8x128xf32, #tpu.memory_space<vmem>>, vector<8x128xf32>,
    %c0_18 = arith.constant 0 : index
    %c0_19 = arith.constant 0 : index
    %37 = vector.load %arg4[%c0_18, %c0_19] : memref<128x128xf32, #tpu.memory_space<vmem>>, vector<128x128xf32>
    %cst_20 = arith.constant dense<0.000000e+00> : vector<8x128xf32>
    %38 = tpu.matmul %34, %37, %cst_20 {dimension_numbers = #tpu.dot_dimension_numbers<[1], [0], [0], [1], [0, 0, 1, 1], [], []>} : vector<8x128xf32>, vector<128x128xf32>, vector<8x128xf32> -> vector<8x128xf32>
    %c0_21 = arith.constant 0 : index
    %c0_22 = arith.constant 0 : index
    %39 = vector.load %arg5[%c0_21, %c0_22] : memref<1x128xf32, #tpu.memory_space<vmem>>, vector<1x128xf32>
    %40 = vector.broadcast %39 : vector<1x128xf32> to vector<8x128xf32>
    %41 = arith.addf %38, %40 : vector<8x128xf32>
    %c0_23 = arith.constant 0 : index
    %c0_24 = arith.constant 0 : index
    %42 = vector.load %arg6[%c0_23, %c0_24] : memref<8x128xf32, #tpu.memory_space<vmem>>, vector<8x128xf32>
    tpu.vector_store %arg6[%c0_23, %c0_24], %41 {strides = array<i32>} : memref<8x128xf32, #tpu.memory_space<vmem>>, vector<8x128xf32>,
    return
  }
  func.func @transform_0(%arg0: i32) -> (i32, i32) {
    %c0_i32 = arith.constant 0 : i32
    %c0_i32_0 = arith.constant 0 : i32
    return %arg0, %c0_i32 : i32, i32
  }
  func.func @transform_1(%arg0: i32) -> (i32, i32) {
    %c0_i32 = arith.constant 0 : i32
    %c0_i32_0 = arith.constant 0 : i32
    return %arg0, %c0_i32 : i32, i32
  }
  func.func @transform_2(%arg0: i32) -> (i32, i32) {
    %c0_i32 = arith.constant 0 : i32
    %c0_i32_0 = arith.constant 0 : i32
    %c0_i32_1 = arith.constant 0 : i32
    return %c0_i32, %c0_i32_0 : i32, i32
  }
  func.func @transform_3(%arg0: i32) -> (i32, i32) {
    %c0_i32 = arith.constant 0 : i32
    %c0_i32_0 = arith.constant 0 : i32
    %c0_i32_1 = arith.constant 0 : i32
    return %c0_i32, %c0_i32_0 : i32, i32
  }
  func.func @transform_4(%arg0: i32) -> (i32, i32) {
    %c0_i32 = arith.constant 0 : i32
    %c0_i32_0 = arith.constant 0 : i32
    %c0_i32_1 = arith.constant 0 : i32
    return %c0_i32, %c0_i32_0 : i32, i32
  }
  func.func @transform_5(%arg0: i32) -> (i32, i32) {
    %c0_i32 = arith.constant 0 : i32
    %c0_i32_0 = arith.constant 0 : i32
    return %arg0, %c0_i32 : i32, i32
  }
  func.func @transform_6(%arg0: i32) -> (i32, i32) {
    %c0_i32 = arith.constant 0 : i32
    %c0_i32_0 = arith.constant 0 : i32
    return %arg0, %c0_i32 : i32, i32
  }
  func.func @transform_7(%arg0: i32) -> (i32, i32) {
    %c0_i32 = arith.constant 0 : i32
    %c0_i32_0 = arith.constant 0 : i32
    return %arg0, %c0_i32 : i32, i32
  }
}

</mosaic_0001>

<llo_original>
// kernel: tpu_custom_call.1
$region0: #{tpu_custom_call.1}
  #allocation0 [shape = 'u32[]', space=smem, size = 0x4, offset = 0x4, fixed_abs, tag = 'smem constant byte address 0x4 - core index']
  #allocation1 [shape = 'u32[144,128]{1,0:T(1,128)}', space=vmem, size = 0x12000, scoped, tag = 'internal scratch']
  %s0 = inlined_call_operand.hbm [shape: f32[8,128], index: 0, kind: input, shape index: {}]
  %s1 = inlined_call_operand.hbm [shape: f32[8,128], index: 1, kind: input, shape index: {}]
  %s2 = inlined_call_operand.hbm [shape: f32[128,512], index: 2, kind: input, shape index: {}]
  %s3 = inlined_call_operand.hbm [shape: f32[128,128], index: 3, kind: input, shape index: {}]
  %s4 = inlined_call_operand.vmem [shape: f32[1,128], index: 4, kind: input, shape index: {}]
  %s5 = inlined_call_operand.hbm [shape: f32[8,128], index: 5, kind: output, shape index: {0}]
  %s6 = inlined_call_operand.hbm [shape: f32[8,128], index: 6, kind: output, shape index: {1}]
  %s7 = inlined_call_operand.hbm [shape: f32[8,128], index: 7, kind: output, shape index: {2}]
  %8 = xla_tuple %s5, %s6, %s7
  %s9 = sld [smem:[#allocation0]]
  $region62: #{tpu_custom_call.1} parent=0
    _
  %s11 = ssub.s32 1, %s9
  %s12 = scalar_select 0, %s11, %s9
  $region1: #{tpu_custom_call.1} parent=0
    #allocation2 [shape = 'u8[4096]{0}', space=vmem, size = 0x1000, scoped, tag = 'input window, operand 0, single buffered']
    #allocation3 [shape = 's32[1]{0}', space=sflag, size = 0x4, scoped, tag = 'scoped memory for tpu_custom_call.1']
    #allocation4 [shape = 's32[1]{0}', space=sflag, size = 0x4, scoped, tag = 'scoped memory for tpu_custom_call.1']
    #allocation5 [shape = 'u8[4096]{0}', space=vmem, size = 0x1000, scoped, tag = 'input window, operand 1, single buffered']
    #allocation6 [shape = 's32[1]{0}', space=sflag, size = 0x4, scoped, tag = 'scoped memory for tpu_custom_call.1']
    #allocation7 [shape = 'u8[262144]{0}', space=vmem, size = 0x40000, scoped, tag = 'input window, operand 2, single buffered']
    #allocation8 [shape = 'u8[65536]{0}', space=vmem, size = 0x10000, scoped, tag = 'input window, operand 3, single buffered']
    #allocation9 [shape = 's32[1]{0}', space=sflag, size = 0x4, scoped, tag = 'scoped memory for tpu_custom_call.1']
    #allocation10 [shape = 'u8[4096]{0}', space=vmem, size = 0x1000, scoped, tag = 'output window, operand 0, single buffered']
    #allocation11 [shape = 'u8[4096]{0}', space=vmem, size = 0x1000, scoped, tag = 'output window, operand 1, single buffered']
    #allocation12 [shape = 's32[1]{0}', space=sflag, size = 0x4, scoped, tag = 'scoped memory for tpu_custom_call.1']
    #allocation13 [shape = 'u8[4096]{0}', space=vmem, size = 0x1000, scoped, tag = 'output window, operand 2, single buffered']
    %13 = vsyncpa [#allocation3], 0
    %14 = vsyncpa [#allocation6], 0
    %15 = vsyncpa [#allocation9], 0
    %16 = vsyncpa [#allocation4], 0
    %17 = vsyncpa [#allocation12], 0
    // Predicated region
    $region2: #{tpu_custom_call.1} parent=1 // pred_check
      _
    $region3: #{tpu_custom_call.1} parent=1 // pred_check_branch
      %19 = sbr.rel (0) target = $region5
    $region4: #{tpu_custom_call.1} parent=1 // pred_region
      %s21 = ssub.s32 128, 128
      %22 = vsyncadd [#allocation3], %s21
      %s24 = sshll.u32 [#allocation2], 4
      %s25 = int_to_ptr.vmem [resolvable:$true] %s24
      %27 = dma.hbm_to_vmem [thread:$0]  %s0, 128, %s25, [#allocation3]
    $region5: #{tpu_custom_call.1} parent=1 // pred_fallthru
      _
    // Predicated region
    $region6: #{tpu_custom_call.1} parent=1 // pred_check
      _
    $region7: #{tpu_custom_call.1} parent=1 // pred_check_branch
      %29 = sbr.rel (0) target = $region9
    $region8: #{tpu_custom_call.1} parent=1 // pred_region
      %s31 = ssub.s32 128, 128
      %32 = vsyncadd [#allocation6], %s31
      %s34 = sshll.u32 [#allocation5], 4
      %s35 = int_to_ptr.vmem [resolvable:$true] %s34
      %37 = dma.hbm_to_vmem [thread:$0]  %s1, 128, %s35, [#allocation6]
    $region9: #{tpu_custom_call.1} parent=1 // pred_fallthru
      _
    // Predicated region
    $region10: #{tpu_custom_call.1} parent=1 // pred_check
      _
    $region11: #{tpu_custom_call.1} parent=1 // pred_check_branch
      %39 = sbr.rel (0) target = $region13
    $region12: #{tpu_custom_call.1} parent=1 // pred_region
      %s41 = ssub.s32 8192, 8192
      %42 = vsyncadd [#allocation6], %s41
      %s43 = sshll.u32 [#allocation7], 4
      %s44 = int_to_ptr.vmem [resolvable:$true] %s43
      %49 = dma.hbm_to_vmem [thread:$0]  %s2, 8192, %s44, [#allocation6], 512, 512, 32
    $region13: #{tpu_custom_call.1} parent=1 // pred_fallthru
      _
    // Predicated region
    $region14: #{tpu_custom_call.1} parent=1 // pred_check
      _
    $region15: #{tpu_custom_call.1} parent=1 // pred_check_branch
      %51 = sbr.rel (0) target = $region17
    $region16: #{tpu_custom_call.1} parent=1 // pred_region
      %s53 = ssub.s32 2048, 2048
      %54 = vsyncadd [#allocation9], %s53
      %s55 = sshll.u32 [#allocation8], 4
      %s56 = int_to_ptr.vmem [resolvable:$true] %s55
      %61 = dma.hbm_to_vmem [thread:$0]  %s3, 2048, %s56, [#allocation9], 128, 128, 8
    $region17: #{tpu_custom_call.1} parent=1 // pred_fallthru
      _
    // Predicated region
    $region18: #{tpu_custom_call.1} parent=1 // pred_check
      _
    $region19: #{tpu_custom_call.1} parent=1 // pred_check_branch
      %63 = sbr.rel (0) target = $region21
    $region20: #{tpu_custom_call.1} parent=1 // pred_region
      _
    $region21: #{tpu_custom_call.1} parent=1 // pred_fallthru
      _
    // Predicated region
    $region22: #{tpu_custom_call.1} parent=1 // pred_check
      _
    $region23: #{tpu_custom_call.1} parent=1 // pred_check_branch
      %65 = sbr.rel (0) target = $region25
    $region24: #{tpu_custom_call.1} parent=1 // pred_region
      %66 = dma.done [#allocation3], 128
    $region25: #{tpu_custom_call.1} parent=1 // pred_fallthru
      _
    // Predicated region
    $region26: #{tpu_custom_call.1} parent=1 // pred_check
      _
    $region27: #{tpu_custom_call.1} parent=1 // pred_check_branch
      %68 = sbr.rel (0) target = $region29
    $region28: #{tpu_custom_call.1} parent=1 // pred_region
      %69 = dma.done [#allocation6], 128
    $region29: #{tpu_custom_call.1} parent=1 // pred_fallthru
      _
    // Predicated region
    $region30: #{tpu_custom_call.1} parent=1 // pred_check
      _
    $region31: #{tpu_custom_call.1} parent=1 // pred_check_branch
      %71 = sbr.rel (0) target = $region33
    $region32: #{tpu_custom_call.1} parent=1 // pred_region
      %72 = dma.done [#allocation6], 8192
    $region33: #{tpu_custom_call.1} parent=1 // pred_fallthru
      _
    // Predicated region
    $region34: #{tpu_custom_call.1} parent=1 // pred_check
      _
    $region35: #{tpu_custom_call.1} parent=1 // pred_check_branch
      %74 = sbr.rel (0) target = $region37
    $region36: #{tpu_custom_call.1} parent=1 // pred_region
      %75 = dma.done [#allocation9], 2048
    $region37: #{tpu_custom_call.1} parent=1 // pred_fallthru
      _
    %v76 = vld [vmem:[#allocation2] sm:$0xff]
    %v77 = vld [vmem:[#allocation7] sm:$0xff]
    %v78 = vld [vmem:[#allocation7 + $0x8] sm:$0xff]
    %v79 = vld [vmem:[#allocation7 + $0x10] sm:$0xff]
    %v80 = vld [vmem:[#allocation7 + $0x18] sm:$0xff]
    %v81 = vld [vmem:[#allocation7 + $0x20] sm:$0xff]
    %v82 = vld [vmem:[#allocation7 + $0x28] sm:$0xff]
    %v83 = vld [vmem:[#allocation7 + $0x30] sm:$0xff]
    %v84 = vld [vmem:[#allocation7 + $0x38] sm:$0xff]
    %v85 = vld [vmem:[#allocation7 + $0x40] sm:$0xff]
    %v86 = vld [vmem:[#allocation7 + $0x48] sm:$0xff]
    %v87 = vld [vmem:[#allocation7 + $0x50] sm:$0xff]
    %v88 = vld [vmem:[#allocation7 + $0x58] sm:$0xff]
    %v89 = vld [vmem:[#allocation7 + $0x60] sm:$0xff]
    %v90 = vld [vmem:[#allocation7 + $0x68] sm:$0xff]
    %v91 = vld [vmem:[#allocation7 + $0x70] sm:$0xff]
    %v92 = vld [vmem:[#allocation7 + $0x78] sm:$0xff]
    %v93 = vld [vmem:[#allocation7 + $0x80] sm:$0xff]
    %v94 = vld [vmem:[#allocation7 + $0x88] sm:$0xff]
    %v95 = vld [vmem:[#allocation7 + $0x90] sm:$0xff]
    %v96 = vld [vmem:[#allocation7 + $0x98] sm:$0xff]
    %v97 = vld [vmem:[#allocation7 + $0xa0] sm:$0xff]
    %v98 = vld [vmem:[#allocation7 + $0xa8] sm:$0xff]
    %v99 = vld [vmem:[#allocation7 + $0xb0] sm:$0xff]
    %v100 = vld [vmem:[#allocation7 + $0xb8] sm:$0xff]
    %v101 = vld [vmem:[#allocation7 + $0xc0] sm:$0xff]
    %v102 = vld [vmem:[#allocation7 + $0xc8] sm:$0xff]
    %v103 = vld [vmem:[#allocation7 + $0xd0] sm:$0xff]
    %v104 = vld [vmem:[#allocation7 + $0xd8] sm:$0xff]
    %v105 = vld [vmem:[#allocation7 + $0xe0] sm:$0xff]
    %v106 = vld [vmem:[#allocation7 + $0xe8] sm:$0xff]
    %v107 = vld [vmem:[#allocation7 + $0xf0] sm:$0xff]
    %v108 = vld [vmem:[#allocation7 + $0xf8] sm:$0xff]
    %v109 = vld [vmem:[#allocation7 + $0x100] sm:$0xff]
    %v110 = vld [vmem:[#allocation7 + $0x108] sm:$0xff]
    %v111 = vld [vmem:[#allocation7 + $0x110] sm:$0xff]
    %v112 = vld [vmem:[#allocation7 + $0x118] sm:$0xff]
    %v113 = vld [vmem:[#allocation7 + $0x120] sm:$0xff]
    %v114 = vld [vmem:[#allocation7 + $0x128] sm:$0xff]
    %v115 = vld [vmem:[#allocation7 + $0x130] sm:$0xff]
    %v116 = vld [vmem:[#allocation7 + $0x138] sm:$0xff]
    %v117 = vld [vmem:[#allocation7 + $0x140] sm:$0xff]
    %v118 = vld [vmem:[#allocation7 + $0x148] sm:$0xff]
    %v119 = vld [vmem:[#allocation7 + $0x150] sm:$0xff]
    %v120 = vld [vmem:[#allocation7 + $0x158] sm:$0xff]
    %v121 = vld [vmem:[#allocation7 + $0x160] sm:$0xff]
    %v122 = vld [vmem:[#allocation7 + $0x168] sm:$0xff]
    %v123 = vld [vmem:[#allocation7 + $0x170] sm:$0xff]
    %v124 = vld [vmem:[#allocation7 + $0x178] sm:$0xff]
    %v125 = vld [vmem:[#allocation7 + $0x180] sm:$0xff]
    %v126 = vld [vmem:[#allocation7 + $0x188] sm:$0xff]
    %v127 = vld [vmem:[#allocation7 + $0x190] sm:$0xff]
    %v128 = vld [vmem:[#allocation7 + $0x198] sm:$0xff]
    %v129 = vld [vmem:[#allocation7 + $0x1a0] sm:$0xff]
    %v130 = vld [vmem:[#allocation7 + $0x1a8] sm:$0xff]
    %v131 = vld [vmem:[#allocation7 + $0x1b0] sm:$0xff]
    %v132 = vld [vmem:[#allocation7 + $0x1b8] sm:$0xff]
    %v133 = vld [vmem:[#allocation7 + $0x1c0] sm:$0xff]
    %v134 = vld [vmem:[#allocation7 + $0x1c8] sm:$0xff]
    %v135 = vld [vmem:[#allocation7 + $0x1d0] sm:$0xff]
    %v136 = vld [vmem:[#allocation7 + $0x1d8] sm:$0xff]
    %v137 = vld [vmem:[#allocation7 + $0x1e0] sm:$0xff]
    %v138 = vld [vmem:[#allocation7 + $0x1e8] sm:$0xff]
    %v139 = vld [vmem:[#allocation7 + $0x1f0] sm:$0xff]
    %v140 = vld [vmem:[#allocation7 + $0x1f8] sm:$0xff]
    %141 = vmatprep.subr.mxu0 %v78
    %142 = vmatpush1.msra.mxu0 %v77
    %143 = vmatprep.subr.mxu0 %v82
    %144 = vmatpush1.msra.mxu0 %v81
    %145 = vmatprep.subr.mxu0 %v86
    %146 = vmatpush1.msra.mxu0 %v85
    %147 = vmatprep.subr.mxu0 %v90
    %148 = vmatpush1.msra.mxu0 %v89
    %149 = vmatprep.subr.mxu0 %v94
    %150 = vmatpush1.msra.mxu0 %v93
    %151 = vmatprep.subr.mxu0 %v98
    %152 = vmatpush1.msra.mxu0 %v97
    %153 = vmatprep.subr.mxu0 %v102
    %154 = vmatpush1.msra.mxu0 %v101
    %155 = vmatprep.subr.mxu0 %v106
    %156 = vmatpush1.msra.mxu0 %v105
    %157 = vmatprep.subr.mxu0 %v110
    %158 = vmatpush1.msra.mxu0 %v109
    %159 = vmatprep.subr.mxu0 %v114
    %160 = vmatpush1.msra.mxu0 %v113
    %161 = vmatprep.subr.mxu0 %v118
    %162 = vmatpush1.msra.mxu0 %v117
    %163 = vmatprep.subr.mxu0 %v122
    %164 = vmatpush1.msra.mxu0 %v121
    %165 = vmatprep.subr.mxu0 %v126
    %166 = vmatpush1.msra.mxu0 %v125
    %167 = vmatprep.subr.mxu0 %v130
    %168 = vmatpush1.msra.mxu0 %v129
    %169 = vmatprep.subr.mxu0 %v134
    %170 = vmatpush1.msra.mxu0 %v133
    %171 = vmatprep.subr.mxu0 %v138
    %172 = vmatpush1.msra.mxu0 %v137
    %173 = vmatprep.subr.mxu0 0.0
    %174 = vmatpush1.msra.mxu0 0.0
    %175 = vmatprep.subr.mxu0 0.0
    %176 = vmatpush1.msra.mxu0 0.0
    %177 = vmatprep.subr.mxu0 0.0
    %178 = vmatpush1.msra.mxu0 0.0
    %179 = vmatprep.subr.mxu0 0.0
    %180 = vmatpush1.msra.mxu0 0.0
    %181 = vmatprep.subr.mxu0 0.0
    %182 = vmatpush1.msra.mxu0 0.0
    %183 = vmatprep.subr.mxu0 0.0
    %184 = vmatpush1.msra.mxu0 0.0
    %185 = vmatprep.subr.mxu0 0.0
    %186 = vmatpush1.msra.mxu0 0.0
    %187 = vmatprep.subr.mxu0 0.0
    %188 = vmatpush1.msra.mxu0 0.0
    %189 = vmatprep.subr.mxu0 0.0
    %190 = vmatpush1.msra.mxu0 0.0
    %191 = vmatprep.subr.mxu0 0.0
    %192 = vmatpush1.msra.mxu0 0.0
    %193 = vmatprep.subr.mxu0 0.0
    %194 = vmatpush1.msra.mxu0 0.0
    %195 = vmatprep.subr.mxu0 0.0
    %196 = vmatpush1.msra.mxu0 0.0
    %197 = vmatprep.subr.mxu0 0.0
    %198 = vmatpush1.msra.mxu0 0.0
    %199 = vmatprep.subr.mxu0 0.0
    %200 = vmatpush1.msra.mxu0 0.0
    %201 = vmatprep.subr.mxu0 0.0
    %202 = vmatpush1.msra.mxu0 0.0
    %203 = vmatprep.subr.mxu0 0.0
    %204 = vmatpush1.msra.mxu0 0.0
    %205 = vmatprep.mubr.f32.mxu0 0.0
    %206 = vmatmul.mubr.f32.gmra.mrb[0].mxu0 %v76
    %v207 = vpop.f32.mrb[0].mxu0
    %v208 = vadd.f32 0.0, %v207
    %v209 = vpop.f32.mrb[0].mxu0
    %v210 = vadd.f32 0.0, %v209
    %211 = vdwg.mxu0
    %212 = vmatprep.subr.mxu0 %v80
    %213 = vmatpush1.msra.mxu0 %v79
    %214 = vmatprep.subr.mxu0 %v84
    %215 = vmatpush1.msra.mxu0 %v83
    %216 = vmatprep.subr.mxu0 %v88
    %217 = vmatpush1.msra.mxu0 %v87
    %218 = vmatprep.subr.mxu0 %v92
    %219 = vmatpush1.msra.mxu0 %v91
    %220 = vmatprep.subr.mxu0 %v96
    %221 = vmatpush1.msra.mxu0 %v95
    %222 = vmatprep.subr.mxu0 %v100
    %223 = vmatpush1.msra.mxu0 %v99
    %224 = vmatprep.subr.mxu0 %v104
    %225 = vmatpush1.msra.mxu0 %v103
    %226 = vmatprep.subr.mxu0 %v108
    %227 = vmatpush1.msra.mxu0 %v107
    %228 = vmatprep.subr.mxu0 %v112
    %229 = vmatpush1.msra.mxu0 %v111
    %230 = vmatprep.subr.mxu0 %v116
    %231 = vmatpush1.msra.mxu0 %v115
    %232 = vmatprep.subr.mxu0 %v120
    %233 = vmatpush1.msra.mxu0 %v119
    %234 = vmatprep.subr.mxu0 %v124
    %235 = vmatpush1.msra.mxu0 %v123
    %236 = vmatprep.subr.mxu0 %v128
    %237 = vmatpush1.msra.mxu0 %v127
    %238 = vmatprep.subr.mxu0 %v132
    %239 = vmatpush1.msra.mxu0 %v131
    %240 = vmatprep.subr.mxu0 %v136
    %241 = vmatpush1.msra.mxu0 %v135
    %242 = vmatprep.subr.mxu0 %v140
    %243 = vmatpush1.msra.mxu0 %v139
    %244 = vmatprep.subr.mxu0 0.0
    %245 = vmatpush1.msra.mxu0 0.0
    %246 = vmatprep.subr.mxu0 0.0
    %247 = vmatpush1.msra.mxu0 0.0
    %248 = vmatprep.subr.mxu0 0.0
    %249 = vmatpush1.msra.mxu0 0.0
    %250 = vmatprep.subr.mxu0 0.0
    %251 = vmatpush1.msra.mxu0 0.0
    %252 = vmatprep.subr.mxu0 0.0
    %253 = vmatpush1.msra.mxu0 0.0
    %254 = vmatprep.subr.mxu0 0.0
    %255 = vmatpush1.msra.mxu0 0.0
    %256 = vmatprep.subr.mxu0 0.0
    %257 = vmatpush1.msra.mxu0 0.0
    %258 = vmatprep.subr.mxu0 0.0
    %259 = vmatpush1.msra.mxu0 0.0
    %260 = vmatprep.subr.mxu0 0.0
    %261 = vmatpush1.msra.mxu0 0.0
    %262 = vmatprep.subr.mxu0 0.0
    %263 = vmatpush1.msra.mxu0 0.0
    %264 = vmatprep.subr.mxu0 0.0
    %265 = vmatpush1.msra.mxu0 0.0
    %266 = vmatprep.subr.mxu0 0.0
    %267 = vmatpush1.msra.mxu0 0.0
    %268 = vmatprep.subr.mxu0 0.0
    %269 = vmatpush1.msra.mxu0 0.0
    %270 = vmatprep.subr.mxu0 0.0
    %271 = vmatpush1.msra.mxu0 0.0
    %272 = vmatprep.subr.mxu0 0.0
    %273 = vmatpush1.msra.mxu0 0.0
    %274 = vmatprep.subr.mxu0 0.0
    %275 = vmatpush1.msra.mxu0 0.0
    %276 = vmatprep.mubr.f32.mxu0 0.0
    %277 = vmatmul.mubr.f32.gmra.mrb[0].mxu0 %v76
    %v278 = vpop.f32.mrb[0].mxu0
    %v279 = vadd.f32 0.0, %v278
    %v280 = vpop.f32.mrb[0].mxu0
    %v281 = vadd.f32 0.0, %v280
    %282 = vdwg.mxu0
    %v283 = vmul.f32 %v208, 0.5
    %v284 = vtanh.pop %v283
    %v285 = vmul.f32 %v284, 0.5
    %v286 = vadd.f32 %v285, 0.5
    %v287 = vmul.f32 %v210, 0.5
    %v288 = vtanh.pop %v287
    %v289 = vmul.f32 %v288, 0.5
    %v290 = vadd.f32 %v289, 0.5
    %v291 = vtanh.pop %v279
    %v292 = vmul.f32 %v281, 0.5
    %v293 = vtanh.pop %v292
    %v294 = vmul.f32 %v293, 0.5
    %v295 = vadd.f32 %v294, 0.5
    %v296 = vld [vmem:[#allocation5] sm:$0xff]
    %v297 = vmul.f32 %v290, %v296
    %v298 = vmul.f32 %v286, %v291
    %v299 = vadd.f32 %v297, %v298
    %v300 = vtanh.pop %v299
    %v301 = vmul.f32 %v295, %v300
    %302 = vst [vmem:[#allocation13] sm:$0xff] %v299
    %303 = vst [vmem:[#allocation11] sm:$0xff] %v301
    %v304 = vld [vmem:[#allocation8] sm:$0xff]
    %v305 = vld [vmem:[#allocation8 + $0x8] sm:$0xff]
    %v306 = vld [vmem:[#allocation8 + $0x10] sm:$0xff]
    %v307 = vld [vmem:[#allocation8 + $0x18] sm:$0xff]
    %v308 = vld [vmem:[#allocation8 + $0x20] sm:$0xff]
    %v309 = vld [vmem:[#allocation8 + $0x28] sm:$0xff]
    %v310 = vld [vmem:[#allocation8 + $0x30] sm:$0xff]
    %v311 = vld [vmem:[#allocation8 + $0x38] sm:$0xff]
    %v312 = vld [vmem:[#allocation8 + $0x40] sm:$0xff]
    %v313 = vld [vmem:[#allocation8 + $0x48] sm:$0xff]
    %v314 = vld [vmem:[#allocation8 + $0x50] sm:$0xff]
    %v315 = vld [vmem:[#allocation8 + $0x58] sm:$0xff]
    %v316 = vld [vmem:[#allocation8 + $0x60] sm:$0xff]
    %v317 = vld [vmem:[#allocation8 + $0x68] sm:$0xff]
    %v318 = vld [vmem:[#allocation8 + $0x70] sm:$0xff]
    %v319 = vld [vmem:[#allocation8 + $0x78] sm:$0xff]
    %v320 = vld [vmem:[%s4] sm:$0x1]
    %v322 = vlaneseq
    %v323 = vshrl.u32 %v322, 7
    %v324 = vsub.s32 0, %v323
    %v325 = vrot.slane %v320, %v324
    %327 = vmatprep.subr.mxu0 0.0
    %328 = vmatpush1.msra.mxu0 %v304
    %329 = vmatprep.subr.mxu0 0.0
    %330 = vmatpush1.msra.mxu0 %v305
    %331 = vmatprep.subr.mxu0 0.0
    %332 = vmatpush1.msra.mxu0 %v306
    %333 = vmatprep.subr.mxu0 0.0
    %334 = vmatpush1.msra.mxu0 %v307
    %335 = vmatprep.subr.mxu0 0.0
    %336 = vmatpush1.msra.mxu0 %v308
    %337 = vmatprep.subr.mxu0 0.0
    %338 = vmatpush1.msra.mxu0 %v309
    %339 = vmatprep.subr.mxu0 0.0
    %340 = vmatpush1.msra.mxu0 %v310
    %341 = vmatprep.subr.mxu0 0.0
    %342 = vmatpush1.msra.mxu0 %v311
    %343 = vmatprep.subr.mxu0 0.0
    %344 = vmatpush1.msra.mxu0 %v312
    %345 = vmatprep.subr.mxu0 0.0
    %346 = vmatpush1.msra.mxu0 %v313
    %347 = vmatprep.subr.mxu0 0.0
    %348 = vmatpush1.msra.mxu0 %v314
    %349 = vmatprep.subr.mxu0 0.0
    %350 = vmatpush1.msra.mxu0 %v315
    %351 = vmatprep.subr.mxu0 0.0
    %352 = vmatpush1.msra.mxu0 %v316
    %353 = vmatprep.subr.mxu0 0.0
    %354 = vmatpush1.msra.mxu0 %v317
    %355 = vmatprep.subr.mxu0 0.0
    %356 = vmatpush1.msra.mxu0 %v318
    %357 = vmatprep.subr.mxu0 0.0
    %358 = vmatpush1.msra.mxu0 %v319
    %359 = vmatprep.subr.mxu0 0.0
    %360 = vmatpush1.msra.mxu0 0.0
    %361 = vmatprep.subr.mxu0 0.0
    %362 = vmatpush1.msra.mxu0 0.0
    %363 = vmatprep.subr.mxu0 0.0
    %364 = vmatpush1.msra.mxu0 0.0
    %365 = vmatprep.subr.mxu0 0.0
    %366 = vmatpush1.msra.mxu0 0.0
    %367 = vmatprep.subr.mxu0 0.0
    %368 = vmatpush1.msra.mxu0 0.0
    %369 = vmatprep.subr.mxu0 0.0
    %370 = vmatpush1.msra.mxu0 0.0
    %371 = vmatprep.subr.mxu0 0.0
    %372 = vmatpush1.msra.mxu0 0.0
    %373 = vmatprep.subr.mxu0 0.0
    %374 = vmatpush1.msra.mxu0 0.0
    %375 = vmatprep.subr.mxu0 0.0
    %376 = vmatpush1.msra.mxu0 0.0
    %377 = vmatprep.subr.mxu0 0.0
    %378 = vmatpush1.msra.mxu0 0.0
    %379 = vmatprep.subr.mxu0 0.0
    %380 = vmatpush1.msra.mxu0 0.0
    %381 = vmatprep.subr.mxu0 0.0
    %382 = vmatpush1.msra.mxu0 0.0
    %383 = vmatprep.subr.mxu0 0.0
    %384 = vmatpush1.msra.mxu0 0.0
    %385 = vmatprep.subr.mxu0 0.0
    %386 = vmatpush1.msra.mxu0 0.0
    %387 = vmatprep.subr.mxu0 0.0
    %388 = vmatpush1.msra.mxu0 0.0
    %389 = vmatprep.subr.mxu0 0.0
    %390 = vmatpush1.msra.mxu0 0.0
    %391 = vmatprep.mubr.f32.mxu0 0.0
    %392 = vmatmul.mubr.f32.gmra.mrb[0].mxu0 %v301
    %v393 = vpop.f32.mrb[0].mxu0
    %v394 = vadd.f32 %v325, %v393
    %v395 = vpop.f32.mrb[0].mxu0
    %396 = vdwg.mxu0
    %397 = vst [vmem:[#allocation10] sm:$0xff] %v394
    // Predicated region
    $region38: #{tpu_custom_call.1} parent=1 // pred_check
      _
    $region39: #{tpu_custom_call.1} parent=1 // pred_check_branch
      %399 = sbr.rel (0) target = $region41
    $region40: #{tpu_custom_call.1} parent=1 // pred_region
      %s401 = ssub.s32 128, 128
      %402 = vsyncadd [#allocation4], %s401
      %s404 = sshll.u32 [#allocation10], 4
      %s405 = int_to_ptr.vmem [resolvable:$true] %s404
      %407 = dma.vmem_to_hbm [thread:$0]  %s405, 128, %s5, [#allocation4]
    $region41: #{tpu_custom_call.1} parent=1 // pred_fallthru
      _
    // Predicated region
    $region42: #{tpu_custom_call.1} parent=1 // pred_check
      _
    $region43: #{tpu_custom_call.1} parent=1 // pred_check_branch
      %409 = sbr.rel (0) target = $region45
    $region44: #{tpu_custom_call.1} parent=1 // pred_region
      %s411 = ssub.s32 128, 128
      %412 = vsyncadd [#allocation12], %s411
      %s414 = sshll.u32 [#allocation11], 4
      %s415 = int_to_ptr.vmem [resolvable:$true] %s414
      %417 = dma.vmem_to_hbm [thread:$0]  %s415, 128, %s6, [#allocation12]
    $region45: #{tpu_custom_call.1} parent=1 // pred_fallthru
      _
    // Predicated region
    $region46: #{tpu_custom_call.1} parent=1 // pred_check
      _
    $region47: #{tpu_custom_call.1} parent=1 // pred_check_branch
      %419 = sbr.rel (0) target = $region49
    $region48: #{tpu_custom_call.1} parent=1 // pred_region
      %s421 = ssub.s32 128, 128
      %422 = vsyncadd [#allocation12], %s421
      %s424 = sshll.u32 [#allocation13], 4
      %s425 = int_to_ptr.vmem [resolvable:$true] %s424
      %427 = dma.vmem_to_hbm [thread:$0]  %s425, 128, %s7, [#allocation12]
    $region49: #{tpu_custom_call.1} parent=1 // pred_fallthru
      _
    // Predicated region
    $region50: #{tpu_custom_call.1} parent=1 // pred_check
      _
    $region51: #{tpu_custom_call.1} parent=1 // pred_check_branch
      %429 = sbr.rel (0) target = $region53
    $region52: #{tpu_custom_call.1} parent=1 // pred_region
      %430 = dma.done [#allocation4], 128
    $region53: #{tpu_custom_call.1} parent=1 // pred_fallthru
      _
    // Predicated region
    $region54: #{tpu_custom_call.1} parent=1 // pred_check
      _
    $region55: #{tpu_custom_call.1} parent=1 // pred_check_branch
      %432 = sbr.rel (0) target = $region57
    $region56: #{tpu_custom_call.1} parent=1 // pred_region
      %433 = dma.done [#allocation12], 128
    $region57: #{tpu_custom_call.1} parent=1 // pred_fallthru
      _
    // Predicated region
    $region58: #{tpu_custom_call.1} parent=1 // pred_check
      _
    $region59: #{tpu_custom_call.1} parent=1 // pred_check_branch
      %435 = sbr.rel (0) target = $region61
    $region60: #{tpu_custom_call.1} parent=1 // pred_region
      %436 = dma.done [#allocation12], 128
    $region61: #{tpu_custom_call.1} parent=1 // pred_fallthru
      _
    %437 = vsyncpa [#allocation3], 1
    %438 = vsyncpa [#allocation6], 1
    %439 = vsyncpa [#allocation9], 1
    %440 = vsyncpa [#allocation4], 1
    %441 = vsyncpa [#allocation12], 1

</llo_original>
